<compile_context>
chip_gen: v7x
topology: tpu7x:2x2x1
jax: 0.10.0
libtpu: 0.0.40
codegen_flags: <defaults>
</compile_context>

<pallas_src>
import math
import functools

import jax
import jax.numpy as jnp
from jax.experimental import pallas as pl
from jax.experimental.pallas import tpu as pltpu


# ---------------------------------------------------------------------------
# pe table construction (plain JAX, mirrors the registered torch buffer)
# ---------------------------------------------------------------------------
def make_positional_encoding_table(d_model: int, max_len: int = 5000):
    """pe buffer, shape [max_len, 1, d_model] (matches the PyTorch module)."""
    position = jnp.arange(max_len, dtype=jnp.float32)[:, None]
    div_term = jnp.exp(
        jnp.arange(0, d_model, 2, dtype=jnp.float32) * (-math.log(10000.0) / d_model)
    )
    pe = jnp.zeros((max_len, 1, d_model), dtype=jnp.float32)
    pe = pe.at[:, 0, 0::2].set(jnp.sin(position * div_term))
    # Guard for odd d_model (the torch original would error): truncate cos part.
    pe = pe.at[:, 0, 1::2].set(jnp.cos(position * div_term)[:, : d_model // 2])
    return pe


def prepare_pe_table(pe, dtype):
    """One-time (init-time) prep: squeeze to [max_len, d_model] and cast to the
    activation dtype, so the per-call hot path pays no slice/convert kernel."""
    if pe.ndim == 3:
        pe = pe[:, 0, :]
    return pe.astype(dtype)


# ---------------------------------------------------------------------------
# Kernels
# ---------------------------------------------------------------------------
def _eval_kernel_3d(x_ref, pe_ref, o_ref):
    # x/o: [TS, B, D], pe: [TS, 1, D] -> sublane broadcast over B, no temp.
    o_ref[...] = (x_ref[...] + pe_ref[...]).astype(o_ref.dtype)


def _eval_kernel_flat(x_ref, pe_ref, o_ref, *, batch, d_model):
    # x/o: [TS, B*D] lane-dense slab, pe: [TS, D].  Per-b adds written straight
    # into the output -- no widened [TS, B*D] pe buffer is ever materialized.
    pe = pe_ref[...]
    for b in range(batch):
        sl = pl.ds(b * d_model, d_model)
        o_ref[:, sl] = (x_ref[:, sl] + pe).astype(o_ref.dtype)


def _dropout_kernel_3d(x_ref, pe_ref, bits_ref, o_ref, *, drop_threshold, inv_keep):
    y = (x_ref[...] + pe_ref[...]).astype(jnp.float32)
    keep = bits_ref[...] >= jnp.asarray(drop_threshold, bits_ref.dtype)
    o_ref[...] = jnp.where(keep, y * jnp.float32(inv_keep), 0.0).astype(o_ref.dtype)


def _dropout_kernel_flat(
    x_ref, pe_ref, bits_ref, o_ref, *, batch, d_model, drop_threshold, inv_keep
):
    pe = pe_ref[...].astype(jnp.float32)
    thr = jnp.asarray(drop_threshold, bits_ref.dtype)
    for b in range(batch):
        sl = pl.ds(b * d_model, d_model)
        y = x_ref[:, sl].astype(jnp.float32) + pe
        keep = bits_ref[:, sl] >= thr
        o_ref[:, sl] = jnp.where(keep, y * jnp.float32(inv_keep), 0.0).astype(o_ref.dtype)


# ---------------------------------------------------------------------------
# Tiling heuristics
# ---------------------------------------------------------------------------
def _round_up(a, m):
    return ((a + m - 1) // m) * m


def _choose_tile_rows(seq_len, row_bytes, itemsize, *, target_block_bytes=4 << 20,
                      min_grid=2):
    """Rows per block: ~4 MiB of streamed bytes per step, rounded to the dtype's
    packed-sublane multiple, never collapsing the grid to 1 when it can split."""
    mult = max(8, 32 // max(1, itemsize))          # 8 f32, 16 bf16, 32 int8/fp8
    rows = max(mult, (target_block_bytes // max(1, row_bytes)) // mult * mult)
    if seq_len >= min_grid * mult:
        # Keep >= min_grid steps so double-buffering overlaps and v7x's 2 TCs
        # both get work under dimension_semantics=("parallel",).
        cap = _round_up(-(-seq_len // min_grid), mult)
        rows = min(rows, cap)
    return min(rows, seq_len)


# ---------------------------------------------------------------------------
# Wrapper
# ---------------------------------------------------------------------------
def positional_encoding_forward(
    x,
    pe_table,
    *,
    dropout_p: float = 0.1,
    training: bool = False,
    rng_key=None,
    donate_x: bool = False,
    target_block_bytes: int = 4 << 20,   # keep <= ~6 MiB for v7x's 64 MiB VMEM
):
    """x: [seq_len, batch, d_model]; pe_table: [max_len, 1, d_model] or the
    prepared 2-D [max_len, d_model] table from prepare_pe_table()."""
    S, B, D = x.shape
    pe2d = pe_table[:, 0, :] if pe_table.ndim == 3 else pe_table
    max_len = pe2d.shape[0]
    if S > max_len:
        raise ValueError(f"seq_len={S} exceeds positional table max_len={max_len}")
    if pe2d.shape[-1] != D:
        raise ValueError("pe table d_model does not match x")
    if pe2d.dtype != x.dtype:
        # Fallback; prefer prepare_pe_table(pe, x.dtype) once at init time.
        pe2d = pe2d.astype(x.dtype)

    itemsize = jnp.dtype(x.dtype).itemsize
    p = float(dropout_p)
    use_dropout = bool(training) and p > 0.0

    bits_itemsize = 0
    drop_threshold = 0
    inv_keep = 1.0
    bits_dtype = None
    if use_dropout:
        # Half-width random bits for sub-32-bit activations (half the entropy
        # bandwidth / compare work); 2^nbits * p is the *drop* threshold.
        bits_dtype = jnp.uint32 if itemsize >= 4 else jnp.uint16
        nbits = jnp.iinfo(bits_dtype).bits
        bits_itemsize = jnp.dtype(bits_dtype).itemsize
        drop_threshold = min(int(round(p * float(2 ** nbits))), 2 ** nbits - 1)
        inv_keep = (1.0 / (1.0 - p)) if p < 1.0 else 0.0
        if rng_key is None:
            rng_key = jax.random.PRNGKey(0)

    # Bytes streamed per sequence row (x + optional bits + pe) drives the tile.
    row_bytes = B * D * (itemsize + bits_itemsize) + D * itemsize
    TS = _choose_tile_rows(S, row_bytes, itemsize,
                           target_block_bytes=target_block_bytes)
    grid = (pl.cdiv(S, TS),)

    # pe block's first dim must be a multiple of 8 or equal the array dim; only
    # slice in the rare ragged case (tiny S not a multiple of 8).
    pe_in = pe2d if TS % 8 == 0 else pe2d[:S]

    cost = pl.CostEstimate(
        flops=S * B * D,
        transcendentals=0,
        bytes_accessed=2 * S * B * D * itemsize
        + S * D * itemsize
        + S * B * D * bits_itemsize,
    )
    cparams = pltpu.CompilerParams(
        dimension_semantics=("parallel",),      # megacore-shardable on v7x
        vmem_limit_bytes=32 * 1024 * 1024,      # double-buffered ~4 MiB blocks, all gens
    )
    io_alias = {0: 0} if donate_x else {}

    use_3d = (D % 128 == 0)

    if use_3d:
        # Lane axis already dense (D multiple of 128): keep 3-D blocks and let
        # the add broadcast pe over the sublane (B) axis.
        pe3 = pe_in.reshape(pe_in.shape[0], 1, D)
        in_specs = [
            pl.BlockSpec((TS, B, D), lambda i: (i, 0, 0)),
            pl.BlockSpec((TS, 1, D), lambda i: (i, 0, 0)),
        ]
        out_spec = pl.BlockSpec((TS, B, D), lambda i: (i, 0, 0))
        out_shape = jax.ShapeDtypeStruct((S, B, D), x.dtype)
        operands = [x, pe3]
        if use_dropout:
            bits = jax.random.bits(rng_key, shape=(S, B, D), dtype=bits_dtype)
            in_specs.append(pl.BlockSpec((TS, B, D), lambda i: (i, 0, 0)))
            operands.append(bits)
            kernel = functools.partial(
                _dropout_kernel_3d, drop_threshold=drop_threshold, inv_keep=inv_keep
            )
        else:
            kernel = _eval_kernel_3d
    else:
        # Flattened lane-dense slab [S, B*D] (free view); per-b writes go
        # straight to the output, no widened pe temp.
        BD = B * D
        x2d = x.reshape(S, BD)
        in_specs = [
            pl.BlockSpec((TS, BD), lambda i: (i, 0)),
            pl.BlockSpec((TS, D), lambda i: (i, 0)),
        ]
        out_spec = pl.BlockSpec((TS, BD), lambda i: (i, 0))
        out_shape = jax.ShapeDtypeStruct((S, BD), x.dtype)
        operands = [x2d, pe_in]
        if use_dropout:
            bits = jax.random.bits(rng_key, shape=(S, BD), dtype=bits_dtype)
            in_specs.append(pl.BlockSpec((TS, BD), lambda i: (i, 0)))
            operands.append(bits)
            kernel = functools.partial(
                _dropout_kernel_flat,
                batch=B,
                d_model=D,
                drop_threshold=drop_threshold,
                inv_keep=inv_keep,
            )
        else:
            kernel = functools.partial(_eval_kernel_flat, batch=B, d_model=D)

    out = pl.pallas_call(
        kernel,
        out_shape=out_shape,
        grid_spec=pl.GridSpec(grid=grid, in_specs=in_specs, out_specs=out_spec),
        compiler_params=cparams,
        cost_estimate=cost,
        input_output_aliases=io_alias,
    )(*operands)

    return out if use_3d else out.reshape(S, B, D)


# ---------------------------------------------------------------------------
# Demo / self-check
# ---------------------------------------------------------------------------
if __name__ == "__main__":
    max_len = 5000

    # ---- Case 1: small d_model (flattened lane-slab path) ------------------
    d_model, seq_len, batch = 32, 8, 2
    key = jax.random.PRNGKey(0)
    x = jax.random.normal(key, (seq_len, batch, d_model), dtype=jnp.float32)
    pe_buf = make_positional_encoding_table(d_model, max_len)      # torch-like buffer
    pe2d = prepare_pe_table(pe_buf, x.dtype)                       # init-time prep

    out = jax.block_until_ready(
        positional_encoding_forward(x, pe2d, dropout_p=0.1, training=False)
    )
    ref = x + pe_buf[:seq_len]                                     # [S,1,D] broadcast
    assert out.shape == (seq_len, batch, d_model)
    assert jnp.allclose(out, ref, atol=1e-6, rtol=1e-6)

    # Training mode smoke test: every element is either 0 or ref/(1-p).
    p = 0.1
    out_tr = jax.block_until_ready(
        positional_encoding_forward(
            x, pe2d, dropout_p=p, training=True, rng_key=jax.random.PRNGKey(123)
        )
    )
    assert out_tr.shape == (seq_len, batch, d_model)
    scaled = ref / (1.0 - p)
    ok = jnp.isclose(out_tr, 0.0, atol=1e-6) | jnp.isclose(
        out_tr, scaled, atol=1e-5, rtol=1e-5
    )
    assert bool(jnp.all(ok))

    # ---- Case 2: d_model % 128 == 0 (3-D broadcast path, 2-step grid) ------
    d2, s2, b2 = 128, 16, 2
    x2 = jax.random.normal(jax.random.PRNGKey(1), (s2, b2, d2), dtype=jnp.float32)
    pe2 = prepare_pe_table(make_positional_encoding_table(d2, max_len), x2.dtype)
    out2 = jax.block_until_ready(
        positional_encoding_forward(x2, pe2, dropout_p=0.1, training=False)
    )
    ref2 = x2 + pe2[:s2][:, None, :]
    assert out2.shape == (s2, b2, d2)
    assert jnp.allclose(out2, ref2, atol=1e-6, rtol=1e-6)

    print("KERNEL_OK")
</pallas_src>

<mosaic_0001>
module attributes {stable_mosaic.version = 11 : i64} {
  func.func @_eval_kernel_flat(%arg0: i32, %arg1: memref<8x64xf32, #tpu.memory_space<vmem>>, %arg2: memref<8x32xf32, #tpu.memory_space<vmem>>, %arg3: memref<8x64xf32, #tpu.memory_space<vmem>>) attributes {dimension_semantics = [#tpu.dimension_semantics<parallel>], iteration_bounds = array<i64: 1>, scalar_prefetch = 0 : i64, scratch_operands = 0 : i64, tpu.core_type = #tpu.core_type<tc>, window_params = [{transform_indices = @transform_0, window_bounds = array<i64: 8, 64>}, {transform_indices = @transform_1, window_bounds = array<i64: 8, 32>}, {transform_indices = @transform_2, window_bounds = array<i64: 8, 64>}]} {
    %c0 = arith.constant 0 : index
    %c0_0 = arith.constant 0 : index
    %0 = vector.load %arg2[%c0, %c0_0] : memref<8x32xf32, #tpu.memory_space<vmem>>, vector<8x32xf32>
    %c0_1 = arith.constant 0 : index
    %c0_2 = arith.constant 0 : index
    %1 = vector.load %arg1[%c0_1, %c0_2] : memref<8x64xf32, #tpu.memory_space<vmem>>, vector<8x32xf32>
    %2 = arith.addf %1, %0 : vector<8x32xf32>
    %c0_3 = arith.constant 0 : index
    %c0_4 = arith.constant 0 : index
    %3 = vector.load %arg3[%c0_3, %c0_4] : memref<8x64xf32, #tpu.memory_space<vmem>>, vector<8x32xf32>
    tpu.vector_store %arg3[%c0_3, %c0_4], %2 {strides = array<i32>} : memref<8x64xf32, #tpu.memory_space<vmem>>, vector<8x32xf32>,
    %c0_5 = arith.constant 0 : index
    %c32 = arith.constant 32 : index
    %4 = vector.load %arg1[%c0_5, %c32] : memref<8x64xf32, #tpu.memory_space<vmem>>, vector<8x32xf32>
    %5 = arith.addf %4, %0 : vector<8x32xf32>
    %c0_6 = arith.constant 0 : index
    %c32_7 = arith.constant 32 : index
    %6 = vector.load %arg3[%c0_6, %c32_7] : memref<8x64xf32, #tpu.memory_space<vmem>>, vector<8x32xf32>
    tpu.vector_store %arg3[%c0_6, %c32_7], %5 {strides = array<i32>} : memref<8x64xf32, #tpu.memory_space<vmem>>, vector<8x32xf32>,
    return
  }
  func.func @transform_0(%arg0: i32) -> (i32, i32) {
    %c0_i32 = arith.constant 0 : i32
    %c0_i32_0 = arith.constant 0 : i32
    return %arg0, %c0_i32 : i32, i32
  }
  func.func @transform_1(%arg0: i32) -> (i32, i32) {
    %c0_i32 = arith.constant 0 : i32
    %c0_i32_0 = arith.constant 0 : i32
    return %arg0, %c0_i32 : i32, i32
  }
  func.func @transform_2(%arg0: i32) -> (i32, i32) {
    %c0_i32 = arith.constant 0 : i32
    %c0_i32_0 = arith.constant 0 : i32
    return %arg0, %c0_i32 : i32, i32
  }
}

</mosaic_0001>

<llo_original>
// kernel: tpu_custom_call.1
$region0: #{tpu_custom_call.1}
  #allocation0 [shape = 'u32[]', space=smem, size = 0x4, offset = 0x4, fixed_abs, tag = 'smem constant byte address 0x4 - core index']
  #allocation1 [shape = 'u32[144,128]{1,0:T(1,128)}', space=vmem, size = 0x12000, scoped, tag = 'internal scratch']
  %s0 = inlined_call_operand.vmem [shape: f32[8,64], index: 0, kind: input, shape index: {}]
  %s1 = inlined_call_operand.vmem [shape: f32[5000,32], index: 1, kind: input, shape index: {}]
  %s2 = inlined_call_operand.hbm [shape: f32[8,64], index: 2, kind: output, shape index: {}]
  %s3 = sld [smem:[#allocation0]]
  $region18: #{tpu_custom_call.1} parent=0
    _
  %s5 = ssub.s32 1, %s3
  %s6 = scalar_select 0, %s5, %s3
  $region1: #{tpu_custom_call.1} parent=0
    #allocation2 [shape = 'u8[4096]{0}', space=vmem, size = 0x1000, scoped, tag = 'output window, operand 0, single buffered']
    #allocation3 [shape = 's32[1]{0}', space=sflag, size = 0x4, scoped, tag = 'scoped memory for tpu_custom_call.1']
    %7 = vsyncpa [#allocation3], 0
    // Predicated region
    $region2: #{tpu_custom_call.1} parent=1 // pred_check
      _
    $region3: #{tpu_custom_call.1} parent=1 // pred_check_branch
      %9 = sbr.rel (0) target = $region5
    $region4: #{tpu_custom_call.1} parent=1 // pred_region
      _
    $region5: #{tpu_custom_call.1} parent=1 // pred_fallthru
      _
    // Predicated region
    $region6: #{tpu_custom_call.1} parent=1 // pred_check
      _
    $region7: #{tpu_custom_call.1} parent=1 // pred_check_branch
      %11 = sbr.rel (0) target = $region9
    $region8: #{tpu_custom_call.1} parent=1 // pred_region
      _
    $region9: #{tpu_custom_call.1} parent=1 // pred_fallthru
      _
    %v12 = vld [vmem:[%s1] sm:$0xff]
    %v13 = vld [vmem:[%s0] sm:$0xff]
    %v14 = vadd.f32 %v13, %v12
    %vm15 = vcmask 261120
    %16 = vst.msk [vmem:[#allocation2] sm:$0xff] %vm15, %v14
    %v17 = vld [vmem:[%s0] sm:$0xff]
    %19 = vrot.lane.b32.xlu0 %v12, 32
    %v20 = vpop.permute.xlu0 %19
    %v22 = vadd.f32 %v17, %v20
    %vm23 = vcmask 523520
    %24 = vst.msk [vmem:[#allocation2] sm:$0xff] %vm23, %v22
    // Predicated region
    $region10: #{tpu_custom_call.1} parent=1 // pred_check
      _
    $region11: #{tpu_custom_call.1} parent=1 // pred_check_branch
      %26 = sbr.rel (0) target = $region13
    $region12: #{tpu_custom_call.1} parent=1 // pred_region
      %s28 = ssub.s32 128, 128
      %29 = vsyncadd [#allocation3], %s28
      %s31 = sshll.u32 [#allocation2], 4
      %s32 = int_to_ptr.vmem [resolvable:$true] %s31
      %34 = dma.vmem_to_hbm [thread:$0]  %s32, 128, %s2, [#allocation3]
    $region13: #{tpu_custom_call.1} parent=1 // pred_fallthru
      _
    // Predicated region
    $region14: #{tpu_custom_call.1} parent=1 // pred_check
      _
    $region15: #{tpu_custom_call.1} parent=1 // pred_check_branch
      %36 = sbr.rel (0) target = $region17
    $region16: #{tpu_custom_call.1} parent=1 // pred_region
      %37 = dma.done [#allocation3], 128
    $region17: #{tpu_custom_call.1} parent=1 // pred_fallthru
      _
    %38 = vsyncpa [#allocation3], 1

</llo_original>
